<compile_context>
chip_gen: v5e
topology: v5e:2x2
jax: 0.10.0
libtpu: 0.0.40
codegen_flags: <defaults>
</compile_context>

<pallas_src>
import math
import functools

import jax
import jax.numpy as jnp
from jax.experimental import pallas as pl
from jax.experimental.pallas import tpu as pltpu


# ----------------------------------------------------------------------------
# Parameter / buffer setup (glue, plain JAX) — matches nn.Module.__init__
# ----------------------------------------------------------------------------
def make_positional_encoding(max_len: int, d_model: int) -> jax.Array:
    """Returns pe with shape [max_len, 1, d_model] (float32). Assumes even d_model."""
    position = jnp.arange(max_len, dtype=jnp.float32)[:, None]          # [L, 1]
    div_term = jnp.exp(
        jnp.arange(0, d_model, 2, dtype=jnp.float32)
        * (-math.log(10000.0) / d_model)
    )                                                                    # [D/2]
    pe = jnp.zeros((max_len, d_model), dtype=jnp.float32)
    pe = pe.at[:, 0::2].set(jnp.sin(position * div_term))
    pe = pe.at[:, 1::2].set(jnp.cos(position * div_term))
    # torch: pe.unsqueeze(0).transpose(0, 1) -> [max_len, 1, d_model]
    return pe[:, None, :]


# ----------------------------------------------------------------------------
# Kernels (blocks are 2-D: x/out = (ts, B*D), pe = (ts, D))
# ----------------------------------------------------------------------------
def _pe_add_kernel(x_ref, pe_ref, o_ref, *, batch):
    pe_b = jnp.tile(pe_ref[...], (1, batch))          # (ts, B*D), broadcast over batch
    o_ref[...] = (x_ref[...] + pe_b).astype(o_ref.dtype)


def _pe_add_dropout_kernel(x_ref, pe_ref, bits_ref, o_ref, *,
                           batch, keep_threshold, scale):
    pe_b = jnp.tile(pe_ref[...], (1, batch))          # (ts, B*D)
    y = x_ref[...] + pe_b
    # drop iff bits < p * 2^32  (pure integer compare; no float conversion)
    keep = bits_ref[...] >= jnp.uint32(keep_threshold)
    y = y * jnp.asarray(scale, dtype=y.dtype)
    o_ref[...] = jnp.where(keep, y, jnp.zeros_like(y)).astype(o_ref.dtype)


# ----------------------------------------------------------------------------
# Tiling helper
# ----------------------------------------------------------------------------
def _pick_seq_tile(seq_len, row_bytes, target_bytes=1 << 20):
    """Pick a seq tile of ~target_bytes (multiple of 8 rows) for double buffering."""
    if seq_len * row_bytes <= target_bytes:
        return int(seq_len)
    ts = (target_bytes // max(row_bytes, 1)) // 8 * 8
    ts = max(8, int(ts))
    return min(ts, int(seq_len))


# ----------------------------------------------------------------------------
# Wrapper
# ----------------------------------------------------------------------------
def positional_encoding_forward(x, pe, *, p=0.1, training=False,
                                rng_key=None, seq_tile=None):
    """
    x:  [seq_len, batch, d_model]
    pe: [max_len, 1, d_model]   (max_len >= seq_len)
    Returns dropout(x + pe[:seq_len]) with the same shape/dtype as x.
    """
    S, B, D = x.shape
    BD = B * D

    # Lane-dense 2-D slabs: seq on sublanes, batch*d_model on lanes.
    x2 = x.reshape(S, BD)
    pe2 = pe[:S, 0, :].astype(x.dtype)                # [S, D], in compute dtype

    row_bytes = BD * x.dtype.itemsize
    if seq_tile is None:
        ts = _pick_seq_tile(S, row_bytes)
    else:
        ts = min(int(seq_tile), S)
        if ts < S:
            ts = max(8, ts // 8 * 8)                  # keep (8,128) sublane alignment
    grid = (pl.cdiv(S, ts),)

    x_spec = pl.BlockSpec((ts, BD), lambda i: (i, 0))
    pe_spec = pl.BlockSpec((ts, D), lambda i: (i, 0))
    o_spec = pl.BlockSpec((ts, BD), lambda i: (i, 0))
    out_shape = jax.ShapeDtypeStruct((S, BD), x.dtype)
    params = pltpu.CompilerParams(dimension_semantics=("parallel",))

    if not training or p == 0.0:
        out2 = pl.pallas_call(
            functools.partial(_pe_add_kernel, batch=B),
            out_shape=out_shape,
            grid=grid,
            in_specs=[x_spec, pe_spec],
            out_specs=o_spec,
            input_output_aliases={0: 0},              # x is dead after this layer
            compiler_params=params,
        )(x2, pe2)
        return out2.reshape(S, B, D)

    if rng_key is None:
        rng_key = jax.random.PRNGKey(0)
    bits = jax.random.bits(rng_key, (S, BD), dtype=jnp.uint32)
    keep_threshold = min(int(p * 4294967296.0), 4294967295)
    scale = 1.0 / (1.0 - p)

    out2 = pl.pallas_call(
        functools.partial(_pe_add_dropout_kernel, batch=B,
                          keep_threshold=keep_threshold, scale=scale),
        out_shape=out_shape,
        grid=grid,
        in_specs=[x_spec, pe_spec, x_spec],           # bits shares x's block spec
        out_specs=o_spec,
        input_output_aliases={0: 0},
        compiler_params=params,
    )(x2, pe2, bits)
    return out2.reshape(S, B, D)


# ----------------------------------------------------------------------------
# Demo / self-check
# ----------------------------------------------------------------------------
if __name__ == "__main__":
    seq_len, batch, d_model = 16, 8, 128
    max_len = 64
    p = 0.1

    key = jax.random.PRNGKey(0)
    kx, kd = jax.random.split(key)
    x = jax.random.normal(kx, (seq_len, batch, d_model), dtype=jnp.float32)
    pe = make_positional_encoding(max_len, d_model)
    ref = x + pe[:seq_len]

    # --- eval-mode forward (dropout = identity), single-tile schedule ---
    out_eval = jax.block_until_ready(
        positional_encoding_forward(x, pe, p=p, training=False))
    assert out_eval.shape == x.shape and out_eval.dtype == x.dtype
    assert jnp.allclose(out_eval, ref, atol=1e-5, rtol=1e-5), "eval mismatch"

    # --- eval-mode forward with an explicit multi-step seq tiling ---
    out_tiled = jax.block_until_ready(
        positional_encoding_forward(x, pe, p=p, training=False, seq_tile=8))
    assert jnp.allclose(out_tiled, ref, atol=1e-5, rtol=1e-5), "tiled mismatch"

    # --- training-mode forward (dropout applied in-kernel) ---
    out_train = jax.block_until_ready(
        positional_encoding_forward(x, pe, p=p, training=True,
                                    rng_key=kd, seq_tile=8))
    assert out_train.shape == x.shape
    # every element is either 0 (dropped) or ref / (1 - p) (kept, rescaled)
    kept = jnp.isclose(out_train, ref / (1.0 - p), atol=1e-5, rtol=1e-5)
    dropped = jnp.isclose(out_train, 0.0, atol=1e-6)
    assert bool(jnp.all(kept | dropped)), "dropout semantics mismatch"

    print("KERNEL_OK")
</pallas_src>

<mosaic_0001>
module attributes {stable_mosaic.version = 11 : i64} {
  func.func @_pe_add_kernel(%arg0: i32, %arg1: memref<16x1024xf32, #tpu.memory_space<vmem>>, %arg2: memref<16x128xf32, #tpu.memory_space<vmem>>, %arg3: memref<16x1024xf32, #tpu.memory_space<vmem>>) attributes {dimension_semantics = [#tpu.dimension_semantics<parallel>], iteration_bounds = array<i64: 1>, scalar_prefetch = 0 : i64, scratch_operands = 0 : i64, tpu.core_type = #tpu.core_type<tc>, window_params = [{transform_indices = @transform_0, window_bounds = array<i64: 16, 1024>}, {transform_indices = @transform_1, window_bounds = array<i64: 16, 128>}, {transform_indices = @transform_2, window_bounds = array<i64: 16, 1024>}]} {
    %c0 = arith.constant 0 : index
    %c0_0 = arith.constant 0 : index
    %0 = vector.load %arg2[%c0, %c0_0] : memref<16x128xf32, #tpu.memory_space<vmem>>, vector<16x128xf32>
    %1 = tpu.concatenate %0, %0, %0, %0, %0, %0, %0, %0 in 1 : vector<16x128xf32>, vector<16x128xf32>, vector<16x128xf32>, vector<16x128xf32>, vector<16x128xf32>, vector<16x128xf32>, vector<16x128xf32>, vector<16x128xf32> -> vector<16x1024xf32>
    %c0_1 = arith.constant 0 : index
    %c0_2 = arith.constant 0 : index
    %2 = vector.load %arg1[%c0_1, %c0_2] : memref<16x1024xf32, #tpu.memory_space<vmem>>, vector<16x1024xf32>
    %3 = arith.addf %2, %1 : vector<16x1024xf32>
    %c0_3 = arith.constant 0 : index
    %c0_4 = arith.constant 0 : index
    %4 = vector.load %arg3[%c0_3, %c0_4] : memref<16x1024xf32, #tpu.memory_space<vmem>>, vector<16x1024xf32>
    tpu.vector_store %arg3[%c0_3, %c0_4], %3 {strides = array<i32>} : memref<16x1024xf32, #tpu.memory_space<vmem>>, vector<16x1024xf32>,
    return
  }
  func.func @transform_0(%arg0: i32) -> (i32, i32) {
    %c0_i32 = arith.constant 0 : i32
    %c0_i32_0 = arith.constant 0 : i32
    return %arg0, %c0_i32 : i32, i32
  }
  func.func @transform_1(%arg0: i32) -> (i32, i32) {
    %c0_i32 = arith.constant 0 : i32
    %c0_i32_0 = arith.constant 0 : i32
    return %arg0, %c0_i32 : i32, i32
  }
  func.func @transform_2(%arg0: i32) -> (i32, i32) {
    %c0_i32 = arith.constant 0 : i32
    %c0_i32_0 = arith.constant 0 : i32
    return %arg0, %c0_i32 : i32, i32
  }
}

</mosaic_0001>

<llo_original>
// kernel: tpu_custom_call.1
$region0: #{tpu_custom_call.1}
  #allocation0 [shape = 'u32[]', space=smem, size = 0x4, offset = 0x4, fixed_abs, tag = 'smem constant byte address 0x4 - core index']
  #allocation1 [shape = 'u32[72,128]{1,0:T(1,128)}', space=vmem, size = 0x9000, scoped, tag = 'internal scratch']
  %s0 = inlined_call_operand.hbm [shape: f32[16,1024], index: 0, kind: input, shape index: {}, may-alias: {0,2}]
  %s1 = inlined_call_operand.vmem [shape: f32[16,128], index: 1, kind: input, shape index: {}]
  %s2 = inlined_call_operand.hbm [shape: f32[16,1024], index: 2, kind: output, shape index: {}, may-alias: {0,2}]
  %s3 = sld [smem:[#allocation0]]
  $region22: #{tpu_custom_call.1} parent=0
    _
  %s5 = ssub.s32 1, %s3
  %s6 = scalar_select 0, %s5, %s3
  $region1: #{tpu_custom_call.1} parent=0
    #allocation2 [shape = 'u8[65536]{0}', space=vmem, size = 0x10000, scoped, tag = 'input window, operand 0, single buffered']
    #allocation3 [shape = 's32[1]{0}', space=sflag, size = 0x4, scoped, tag = 'scoped memory for tpu_custom_call.1']
    #allocation4 [shape = 's32[1]{0}', space=sflag, size = 0x4, scoped, tag = 'scoped memory for tpu_custom_call.1']
    #allocation5 [shape = 'u8[65536]{0}', space=vmem, size = 0x10000, scoped, tag = 'output window, operand 0, single buffered']
    %7 = vsyncpa [#allocation3], 0
    %8 = vsyncpa [#allocation4], 0
    // Predicated region
    $region2: #{tpu_custom_call.1} parent=1 // pred_check
      _
    $region3: #{tpu_custom_call.1} parent=1 // pred_check_branch
      %10 = sbr.rel (0) target = $region5
    $region4: #{tpu_custom_call.1} parent=1 // pred_region
      %12 = vsyncadd [#allocation3], 0
      %s13 = sshll.u32 %s0, 4
      %s14 = int_to_ptr.hbm [resolvable:$true] %s13
      %s15 = sshll.u32 [#allocation2], 4
      %s16 = int_to_ptr.vmem [resolvable:$true] %s15
      %21 = dma.hbm_to_vmem [thread:$0]  %s14, 2048, %s16, [#allocation3], 1024, 1024, 64
    $region5: #{tpu_custom_call.1} parent=1 // pred_fallthru
      _
    // Predicated region
    $region6: #{tpu_custom_call.1} parent=1 // pred_check
      _
    $region7: #{tpu_custom_call.1} parent=1 // pred_check_branch
      %23 = sbr.rel (0) target = $region9
    $region8: #{tpu_custom_call.1} parent=1 // pred_region
      _
    $region9: #{tpu_custom_call.1} parent=1 // pred_fallthru
      _
    // Predicated region
    $region10: #{tpu_custom_call.1} parent=1 // pred_check
      _
    $region11: #{tpu_custom_call.1} parent=1 // pred_check_branch
      %25 = sbr.rel (0) target = $region13
    $region12: #{tpu_custom_call.1} parent=1 // pred_region
      %27 = dma.done [#allocation3], 2048
    $region13: #{tpu_custom_call.1} parent=1 // pred_fallthru
      _
    %v28 = vld [vmem:[%s1] sm:$0xff]
    %v29 = vld [vmem:[%s1 + $0x8] sm:$0xff]
    %v30 = vld [vmem:[#allocation2] sm:$0xff]
    %v31 = vld [vmem:[#allocation2 + $0x8] sm:$0xff]
    %v32 = vld [vmem:[#allocation2 + $0x10] sm:$0xff]
    %v33 = vld [vmem:[#allocation2 + $0x18] sm:$0xff]
    %v34 = vld [vmem:[#allocation2 + $0x20] sm:$0xff]
    %v35 = vld [vmem:[#allocation2 + $0x28] sm:$0xff]
    %v36 = vld [vmem:[#allocation2 + $0x30] sm:$0xff]
    %v37 = vld [vmem:[#allocation2 + $0x38] sm:$0xff]
    %v38 = vld [vmem:[#allocation2 + $0x40] sm:$0xff]
    %v39 = vld [vmem:[#allocation2 + $0x48] sm:$0xff]
    %v40 = vld [vmem:[#allocation2 + $0x50] sm:$0xff]
    %v41 = vld [vmem:[#allocation2 + $0x58] sm:$0xff]
    %v42 = vld [vmem:[#allocation2 + $0x60] sm:$0xff]
    %v43 = vld [vmem:[#allocation2 + $0x68] sm:$0xff]
    %v44 = vld [vmem:[#allocation2 + $0x70] sm:$0xff]
    %v45 = vld [vmem:[#allocation2 + $0x78] sm:$0xff]
    %v46 = vadd.f32 %v30, %v28
    %v47 = vadd.f32 %v31, %v28
    %v48 = vadd.f32 %v32, %v28
    %v49 = vadd.f32 %v33, %v28
    %v50 = vadd.f32 %v34, %v28
    %v51 = vadd.f32 %v35, %v28
    %v52 = vadd.f32 %v36, %v28
    %v53 = vadd.f32 %v37, %v28
    %v54 = vadd.f32 %v38, %v29
    %v55 = vadd.f32 %v39, %v29
    %v56 = vadd.f32 %v40, %v29
    %v57 = vadd.f32 %v41, %v29
    %v58 = vadd.f32 %v42, %v29
    %v59 = vadd.f32 %v43, %v29
    %v60 = vadd.f32 %v44, %v29
    %v61 = vadd.f32 %v45, %v29
    %62 = vst [vmem:[#allocation5] sm:$0xff] %v46
    %63 = vst [vmem:[#allocation5 + $0x8] sm:$0xff] %v47
    %64 = vst [vmem:[#allocation5 + $0x10] sm:$0xff] %v48
    %65 = vst [vmem:[#allocation5 + $0x18] sm:$0xff] %v49
    %66 = vst [vmem:[#allocation5 + $0x20] sm:$0xff] %v50
    %67 = vst [vmem:[#allocation5 + $0x28] sm:$0xff] %v51
    %68 = vst [vmem:[#allocation5 + $0x30] sm:$0xff] %v52
    %69 = vst [vmem:[#allocation5 + $0x38] sm:$0xff] %v53
    %70 = vst [vmem:[#allocation5 + $0x40] sm:$0xff] %v54
    %71 = vst [vmem:[#allocation5 + $0x48] sm:$0xff] %v55
    %72 = vst [vmem:[#allocation5 + $0x50] sm:$0xff] %v56
    %73 = vst [vmem:[#allocation5 + $0x58] sm:$0xff] %v57
    %74 = vst [vmem:[#allocation5 + $0x60] sm:$0xff] %v58
    %75 = vst [vmem:[#allocation5 + $0x68] sm:$0xff] %v59
    %76 = vst [vmem:[#allocation5 + $0x70] sm:$0xff] %v60
    %77 = vst [vmem:[#allocation5 + $0x78] sm:$0xff] %v61
    // Predicated region
    $region14: #{tpu_custom_call.1} parent=1 // pred_check
      _
    $region15: #{tpu_custom_call.1} parent=1 // pred_check_branch
      %79 = sbr.rel (0) target = $region17
    $region16: #{tpu_custom_call.1} parent=1 // pred_region
      %81 = vsyncadd [#allocation4], 0
      %s82 = sshll.u32 [#allocation5], 4
      %s83 = int_to_ptr.vmem [resolvable:$true] %s82
      %s84 = sshll.u32 %s2, 4
      %s85 = int_to_ptr.hbm [resolvable:$true] %s84
      %90 = dma.vmem_to_hbm [thread:$0]  %s83, 2048, %s85, [#allocation4], 1024, 1024, 64
    $region17: #{tpu_custom_call.1} parent=1 // pred_fallthru
      _
    // Predicated region
    $region18: #{tpu_custom_call.1} parent=1 // pred_check
      _
    $region19: #{tpu_custom_call.1} parent=1 // pred_check_branch
      %92 = sbr.rel (0) target = $region21
    $region20: #{tpu_custom_call.1} parent=1 // pred_region
      %94 = dma.done [#allocation4], 2048
    $region21: #{tpu_custom_call.1} parent=1 // pred_fallthru
      _
    %95 = vsyncpa [#allocation3], 1
    %96 = vsyncpa [#allocation4], 1

</llo_original>
